<compile_context>
chip_gen: v7x
topology: tpu7x:2x2x1
jax: 0.10.0
libtpu: 0.0.40
codegen_flags: <defaults>
</compile_context>

<pallas_src>
import jax
import jax.numpy as jnp
from jax import lax
from jax.experimental import pallas as pl
from jax.experimental.pallas import tpu as pltpu

_MiB = 1024 * 1024
_MIN_CHUNK = 512          # minimum in-kernel HW chunk (lanes), single-pass path
_MAX_CHUNKS = 8           # static chunk count bound, single-pass path


def _round_up(x, m):
    return ((x + m - 1) // m) * m


def _vmem_budget_bytes():
    """Usable VMEM budget: 3/4 of capacity, but always leave >=24 MiB headroom
    for Mosaic-internal scratch (matters on 64 MiB-VMEM parts)."""
    cap = 64 * _MiB  # conservative fallback if discovery fails
    try:
        cap = int(pltpu.get_tpu_info().vmem_capacity_bytes)
    except Exception:
        pass
    return max(24 * _MiB, min((cap * 3) // 4, cap - 24 * _MiB))


def _chunk_plan(hw):
    """Static (offset, size) chunks covering [0, hw) along the lane dim."""
    chunk = max(_MIN_CHUNK, _round_up(-(-hw // _MAX_CHUNKS), 128))
    return tuple((off, min(chunk, hw - off)) for off in range(0, hw, chunk))


# --------------------- single-pass kernel -----------------------------------

def _make_single_pass_kernel(eps, mode, after_relu, chunks):
    def _partial_sum(x):
        x = x.astype(jnp.float32)
        if mode == "l2":
            return jnp.sum(x * x, axis=-1)
        xs = x if after_relu else jnp.abs(x)
        return jnp.sum(xs, axis=-1)

    def kernel(x_ref, params_ref, o_ref):
        bn = x_ref.shape[0]
        c = x_ref.shape[1]

        # Per-channel reduction over HW, in static chunks: never materializes
        # a full-block f32 temporary (footprint stays ~4 blocks + one chunk).
        acc = jnp.zeros((bn, c), jnp.float32)
        for off, size in chunks:
            acc = acc + _partial_sum(x_ref[:, :, pl.ds(off, size)])

        # Gate math, all f32.  params is (3, C) = [alpha; gamma; beta] with C
        # on lanes, matching the (bn, C) reduction layout (no relayout here).
        params = params_ref[...].astype(jnp.float32)
        alpha = params[0:1, :]
        gamma = params[1:2, :]
        beta = params[2:3, :]
        if mode == "l2":
            embedding = jnp.sqrt(acc + eps) * alpha                     # (bn, C)
            mean_c = jnp.mean(embedding * embedding, axis=1, keepdims=True)
            norm = gamma * lax.rsqrt(mean_c + eps)
        else:  # "l1"
            embedding = acc * alpha
            mean_c = jnp.mean(jnp.abs(embedding), axis=1, keepdims=True)
            norm = gamma / (mean_c + eps)
        gate = (1.0 + jnp.tanh(embedding * norm + beta))[:, :, None]    # (bn,C,1)

        # Apply: f32 multiply, single downcast, chunked to bound f32 temps.
        for off, size in chunks:
            xc = x_ref[:, :, pl.ds(off, size)].astype(jnp.float32)
            o_ref[:, :, pl.ds(off, size)] = (xc * gate).astype(o_ref.dtype)

    return kernel


# --------------------- two-pass kernels -------------------------------------

def _make_reduce_kernel(mode, after_relu, hw, tk):
    n_k = -(-hw // tk)
    rem = hw % tk

    def _partial_sum(x):
        x = x.astype(jnp.float32)
        if mode == "l2":
            return jnp.sum(x * x, axis=-1, keepdims=True)
        xs = x if after_relu else jnp.abs(x)
        return jnp.sum(xs, axis=-1, keepdims=True)

    def kernel(x_ref, sum_ref):
        k = pl.program_id(2)

        @pl.when(k == 0)
        def _init():
            sum_ref[...] = jnp.zeros_like(sum_ref)

        if rem == 0:
            sum_ref[...] += _partial_sum(x_ref[...])
        else:
            @pl.when(k < n_k - 1)
            def _full_tile():
                sum_ref[...] += _partial_sum(x_ref[...])

            @pl.when(k == n_k - 1)
            def _tail_tile():
                # Only the first `rem` lanes of the boundary block are valid;
                # the static slice never touches the uninitialized columns.
                sum_ref[...] += _partial_sum(x_ref[:, :, pl.ds(0, rem)])

    return kernel


def _apply_kernel(x_ref, gate_ref, o_ref):
    # f32 multiply, single downcast to the output dtype.
    o_ref[...] = (x_ref[...].astype(jnp.float32) * gate_ref[...]).astype(o_ref.dtype)


# --------------------- wrapper -----------------------------------------------

def gct_forward(x_nchw, alpha, gamma, beta, *, epsilon=1e-5, mode="l2",
                after_relu=False, max_single_pass_bytes=None,
                batch_block=None, two_pass_tile_bytes=None, alias_input=False):
    """GCT forward.  x_nchw: (N, C, H, W); alpha/gamma/beta: (1, C, 1, 1)."""
    if mode not in ("l2", "l1"):
        raise ValueError("Unknown mode!")

    N, C, H, W = x_nchw.shape
    HW = H * W
    dtype = x_nchw.dtype
    itemsize = jnp.dtype(dtype).itemsize
    eps = float(epsilon)

    x = x_nchw.reshape(N, C, HW)            # no padding: kernels handle ragged HW

    vmem_limit = int(_vmem_budget_bytes())
    budget = vmem_limit if max_single_pass_bytes is None else int(max_single_pass_bytes)

    # ---------------- single-pass plan ----------------------------------------
    chunks = _chunk_plan(HW)
    max_chunk = max(size for _, size in chunks)
    per_image = C * HW * itemsize
    params_vmem = 2 * 8 * _round_up(C, 128) * 4
    per_bn_cost = 4 * per_image + 2 * C * max_chunk * 4     # 2x in + 2x out + chunk f32 temps
    avail = budget - params_vmem - 1 * _MiB

    bn = 0
    if avail >= per_bn_cost:
        target = 3 * _MiB if vmem_limit < 64 * _MiB else 6 * _MiB
        bn = int(min(N, max(1, target // max(1, per_image)), avail // per_bn_cost))
        bn = max(1, bn)
        if batch_block is not None:
            bn = int(max(1, min(N, batch_block)))

    if bn > 0:
        # Pack parameters as (3, C) f32 (C on lanes, matching the in-kernel
        # reduction layout) -> a single tiny DMA, fetched once.
        params = jnp.concatenate(
            [alpha.reshape(1, C), gamma.reshape(1, C), beta.reshape(1, C)],
            axis=0).astype(jnp.float32)

        kernel = _make_single_pass_kernel(eps, mode, after_relu, chunks)
        out = pl.pallas_call(
            kernel,
            out_shape=jax.ShapeDtypeStruct((N, C, HW), dtype),
            grid_spec=pltpu.PrefetchScalarGridSpec(
                num_scalar_prefetch=0,
                grid=(pl.cdiv(N, bn),),
                in_specs=[
                    pl.BlockSpec((bn, C, HW), lambda n: (n, 0, 0)),
                    pl.BlockSpec((3, C), lambda n: (0, 0)),
                ],
                out_specs=pl.BlockSpec((bn, C, HW), lambda n: (n, 0, 0)),
            ),
            compiler_params=pltpu.CompilerParams(
                dimension_semantics=("parallel",),
                vmem_limit_bytes=vmem_limit),
            cost_estimate=pl.CostEstimate(
                flops=int(4 * N * C * HW),
                transcendentals=int(3 * N * C),
                bytes_accessed=int(2 * N * C * HW * itemsize + 3 * C * 4)),
            input_output_aliases=({0: 0} if alias_input else {}),
        )(x, params)
        return out.reshape(N, C, H, W)

    # ---------------- two-pass fallback ---------------------------------------
    tile_target = (min(8 * _MiB, vmem_limit // 10) if two_pass_tile_bytes is None
                   else int(two_pass_tile_bytes))

    # Pass 1: per-(n, c) reduction over HW.  Split channels when N is tiny so
    # both TensorCores (v7x megacore) get parallel work.
    n_c = 2 if (N < 2 and C >= 16 and C % 16 == 0) else 1
    tc = C // n_c
    tk1 = max(128, (tile_target // max(1, tc * itemsize)) // 128 * 128)
    if tk1 >= HW:
        tk1 = HW
    n_k1 = pl.cdiv(HW, tk1)

    reduce_kernel = _make_reduce_kernel(mode, after_relu, HW, tk1)
    sums = pl.pallas_call(
        reduce_kernel,
        out_shape=jax.ShapeDtypeStruct((N, C, 1), jnp.float32),
        grid_spec=pltpu.PrefetchScalarGridSpec(
            num_scalar_prefetch=0,
            grid=(N, n_c, n_k1),
            in_specs=[pl.BlockSpec((1, tc, tk1), lambda n, c, k: (n, c, k))],
            out_specs=pl.BlockSpec((1, tc, 1), lambda n, c, k: (n, c, 0)),
        ),
        compiler_params=pltpu.CompilerParams(
            dimension_semantics=("parallel", "parallel", "arbitrary"),
            vmem_limit_bytes=vmem_limit),
        cost_estimate=pl.CostEstimate(
            flops=int(2 * N * C * HW), transcendentals=0,
            bytes_accessed=int(N * C * HW * itemsize + N * C * 4)),
    )(x)

    # Gate math hoisted to plain XLA: O(N*C) work, negligible, keeps the
    # Pallas grids fully parallel.
    s = sums[:, :, 0]
    a2 = alpha.reshape(1, C).astype(jnp.float32)
    g2 = gamma.reshape(1, C).astype(jnp.float32)
    b2 = beta.reshape(1, C).astype(jnp.float32)
    if mode == "l2":
        emb = jnp.sqrt(s + eps) * a2
        norm = g2 * lax.rsqrt(jnp.mean(emb * emb, axis=1, keepdims=True) + eps)
    else:
        emb = s * a2
        norm = g2 / (jnp.mean(jnp.abs(emb), axis=1, keepdims=True) + eps)
    gate = (1.0 + jnp.tanh(emb * norm + b2))[:, :, None]          # (N, C, 1) f32

    # Pass 2: elementwise apply of the gate, tiled over HW.
    tk2 = max(128, (tile_target // max(1, C * itemsize)) // 128 * 128)
    if tk2 >= HW:
        tk2 = HW
    n_k2 = pl.cdiv(HW, tk2)

    out = pl.pallas_call(
        _apply_kernel,
        out_shape=jax.ShapeDtypeStruct((N, C, HW), dtype),
        grid_spec=pltpu.PrefetchScalarGridSpec(
            num_scalar_prefetch=0,
            grid=(N, n_k2),
            in_specs=[
                pl.BlockSpec((1, C, tk2), lambda n, k: (n, 0, k)),
                pl.BlockSpec((1, C, 1), lambda n, k: (n, 0, 0)),
            ],
            out_specs=pl.BlockSpec((1, C, tk2), lambda n, k: (n, 0, k)),
        ),
        compiler_params=pltpu.CompilerParams(
            dimension_semantics=("parallel", "parallel"),
            vmem_limit_bytes=vmem_limit),
        cost_estimate=pl.CostEstimate(
            flops=int(N * C * HW), transcendentals=0,
            bytes_accessed=int(2 * N * C * HW * itemsize + N * C * 4)),
        input_output_aliases=({0: 0} if alias_input else {}),
    )(x, gate)
    return out.reshape(N, C, H, W)


# --------------------- pure-JAX reference ------------------------------------

def gct_reference(x, alpha, gamma, beta, *, epsilon=1e-5, mode="l2",
                  after_relu=False):
    x = x.astype(jnp.float32)
    if mode == "l2":
        embedding = jnp.power(
            jnp.sum(x ** 2, axis=(2, 3), keepdims=True) + epsilon, 0.5) * alpha
        norm = gamma / jnp.power(
            jnp.mean(embedding ** 2, axis=1, keepdims=True) + epsilon, 0.5)
    else:
        _x = x if after_relu else jnp.abs(x)
        embedding = jnp.sum(_x, axis=(2, 3), keepdims=True) * alpha
        norm = gamma / (jnp.mean(jnp.abs(embedding), axis=1, keepdims=True)
                        + epsilon)
    gate = 1.0 + jnp.tanh(embedding * norm + beta)
    return x * gate


if __name__ == "__main__":
    key = jax.random.PRNGKey(0)
    kx, kg, kb, kx2, kx3, kx4 = jax.random.split(key, 6)

    def check(out, ref, atol, rtol, tag):
        ok = jnp.allclose(out.astype(jnp.float32), ref, atol=atol, rtol=rtol)
        assert bool(ok), (tag, float(jnp.max(jnp.abs(out.astype(jnp.float32) - ref))))

    N, C, H, W = 2, 4, 16, 16
    x = jax.random.normal(kx, (N, C, H, W), dtype=jnp.float32)
    alpha = jnp.ones((1, C, 1, 1), dtype=jnp.float32)
    gamma = 0.5 * jax.random.normal(kg, (1, C, 1, 1), dtype=jnp.float32)
    beta = 0.1 * jax.random.normal(kb, (1, C, 1, 1), dtype=jnp.float32)

    # 1) single-pass path (batched N per grid step), l2 mode, f32.
    out = jax.block_until_ready(gct_forward(x, alpha, gamma, beta, mode="l2"))
    ref = gct_reference(x, alpha, gamma, beta, mode="l2")
    assert out.shape == (N, C, H, W) and out.dtype == x.dtype
    check(out, ref, 1e-5, 1e-5, "single_l2")

    # 2) forced two-pass path, l2 mode.
    out2 = jax.block_until_ready(
        gct_forward(x, alpha, gamma, beta, mode="l2", max_single_pass_bytes=0))
    check(out2, ref, 1e-5, 1e-5, "two_pass_l2")

    # 3) forced two-pass, l1 mode, ragged spatial (HW=169) + tiny tiles so the
    #    boundary-tile masking and boundary writes are exercised.
    x3 = jax.random.normal(kx2, (N, C, 13, 13), dtype=jnp.float32)
    out3 = jax.block_until_ready(
        gct_forward(x3, alpha, gamma, beta, mode="l1", after_relu=False,
                    max_single_pass_bytes=0, two_pass_tile_bytes=2048))
    ref3 = gct_reference(x3, alpha, gamma, beta, mode="l1", after_relu=False)
    check(out3, ref3, 1e-5, 1e-5, "two_pass_l1_ragged")

    # 4) forced two-pass with N=1, C=16 -> channel-split pass-1 grid.
    C4 = 16
    x4 = jax.random.normal(kx3, (1, C4, 16, 16), dtype=jnp.float32)
    a4 = jnp.ones((1, C4, 1, 1), jnp.float32)
    g4 = 0.5 * jax.random.normal(kg, (1, C4, 1, 1), jnp.float32)
    b4 = 0.1 * jax.random.normal(kb, (1, C4, 1, 1), jnp.float32)
    out4 = jax.block_until_ready(
        gct_forward(x4, a4, g4, b4, mode="l2", max_single_pass_bytes=0))
    ref4 = gct_reference(x4, a4, g4, b4, mode="l2")
    check(out4, ref4, 1e-5, 1e-5, "two_pass_csplit")

    # 5) bf16 input, single-pass (f32 gate math / f32 apply, one downcast).
    C5 = 8
    x5 = jax.random.normal(kx4, (2, C5, 16, 16), dtype=jnp.bfloat16)
    a5 = jnp.ones((1, C5, 1, 1), jnp.float32)
    g5 = 0.5 * jax.random.normal(kg, (1, C5, 1, 1), jnp.float32)
    b5 = 0.1 * jax.random.normal(kb, (1, C5, 1, 1), jnp.float32)
    out5 = jax.block_until_ready(gct_forward(x5, a5, g5, b5, mode="l2"))
    ref5 = gct_reference(x5, a5, g5, b5, mode="l2")
    assert out5.dtype == jnp.bfloat16
    check(out5, ref5, 5e-2, 5e-2, "single_bf16")

    # 6) l1 / after_relu, N=3 with batch_block=2 -> boundary batch block.
    x6 = jnp.maximum(jax.random.normal(kx2, (3, C, 16, 16), dtype=jnp.float32), 0.0)
    out6 = jax.block_until_ready(
        gct_forward(x6, alpha, gamma, beta, mode="l1", after_relu=True,
                    batch_block=2))
    ref6 = gct_reference(x6, alpha, gamma, beta, mode="l1", after_relu=True)
    check(out6, ref6, 1e-5, 1e-5, "single_l1_relu_boundary")

    print("KERNEL_OK")
</pallas_src>

<mosaic_0001>
module attributes {stable_mosaic.version = 11 : i64} {
  func.func @kernel(%arg0: i32, %arg1: memref<2x4x256xf32, #tpu.memory_space<vmem>>, %arg2: memref<3x4xf32, #tpu.memory_space<vmem>>, %arg3: memref<2x4x256xf32, #tpu.memory_space<vmem>>) attributes {dimension_semantics = [#tpu.dimension_semantics<parallel>], iteration_bounds = array<i64: 1>, scalar_prefetch = 0 : i64, scratch_operands = 0 : i64, tpu.core_type = #tpu.core_type<tc>, window_params = [{transform_indices = @transform_0, window_bounds = array<i64: 2, 4, 256>}, {pipeline_mode = #tpu.pipeline_mode<synchronous>, transform_indices = @transform_1, window_bounds = array<i64: 3, 4>}, {transform_indices = @transform_2, window_bounds = array<i64: 2, 4, 256>}]} {
    %cst = arith.constant 0.000000e+00 : f32
    %0 = vector.broadcast %cst : f32 to vector<2x4xf32>
    %c0 = arith.constant 0 : index
    %c0_0 = arith.constant 0 : index
    %c0_1 = arith.constant 0 : index
    %1 = vector.load %arg1[%c0, %c0_0, %c0_1] : memref<2x4x256xf32, #tpu.memory_space<vmem>>, vector<2x4x256xf32>
    %2 = arith.mulf %1, %1 : vector<2x4x256xf32>
    %cst_2 = arith.constant dense<0.000000e+00> : vector<2x4xf32>
    %3 = vector.multi_reduction <add>, %2, %cst_2 [2] : vector<2x4x256xf32> to vector<2x4xf32>
    %4 = arith.addf %0, %3 : vector<2x4xf32>
    %c0_3 = arith.constant 0 : index
    %c0_4 = arith.constant 0 : index
    %5 = vector.load %arg2[%c0_3, %c0_4] : memref<3x4xf32, #tpu.memory_space<vmem>>, vector<3x4xf32>
    %6 = vector.extract_strided_slice %5 {offsets = [0, 0], sizes = [1, 4], strides = [1, 1]} : vector<3x4xf32> to vector<1x4xf32>
    %7 = vector.extract_strided_slice %5 {offsets = [1, 0], sizes = [1, 4], strides = [1, 1]} : vector<3x4xf32> to vector<1x4xf32>
    %8 = vector.extract_strided_slice %5 {offsets = [2, 0], sizes = [1, 4], strides = [1, 1]} : vector<3x4xf32> to vector<1x4xf32>
    %cst_5 = arith.constant 9.99999974E-6 : f32
    %9 = vector.broadcast %cst_5 : f32 to vector<2x4xf32>
    %10 = arith.addf %4, %9 : vector<2x4xf32>
    %11 = math.sqrt %10 : vector<2x4xf32>
    %12 = vector.broadcast %6 : vector<1x4xf32> to vector<2x4xf32>
    %13 = arith.mulf %11, %12 : vector<2x4xf32>
    %14 = arith.mulf %13, %13 : vector<2x4xf32>
    %cst_6 = arith.constant dense<0.000000e+00> : vector<2xf32>
    %15 = vector.multi_reduction <add>, %14, %cst_6 [1] : vector<2x4xf32> to vector<2xf32>
    %16 = vector.shape_cast %15 : vector<2xf32> to vector<2x1xf32>
    %cst_7 = arith.constant 4.000000e+00 : f32
    %17 = vector.broadcast %cst_7 : f32 to vector<2x1xf32>
    %18 = arith.divf %16, %17 : vector<2x1xf32>
    %cst_8 = arith.constant 9.99999974E-6 : f32
    %19 = vector.broadcast %cst_8 : f32 to vector<2x1xf32>
    %20 = arith.addf %18, %19 : vector<2x1xf32>
    %21 = math.rsqrt %20 : vector<2x1xf32>
    %22 = vector.broadcast %7 : vector<1x4xf32> to vector<2x4xf32>
    %23 = vector.broadcast %21 : vector<2x1xf32> to vector<2x4xf32>
    %24 = arith.mulf %22, %23 : vector<2x4xf32>
    %25 = arith.mulf %13, %24 : vector<2x4xf32>
    %26 = vector.broadcast %8 : vector<1x4xf32> to vector<2x4xf32>
    %27 = arith.addf %25, %26 : vector<2x4xf32>
    %28 = math.tanh %27 : vector<2x4xf32>
    %cst_9 = arith.constant 1.000000e+00 : f32
    %29 = vector.broadcast %cst_9 : f32 to vector<2x4xf32>
    %30 = arith.addf %29, %28 : vector<2x4xf32>
    %31 = vector.shape_cast %30 : vector<2x4xf32> to vector<2x4x1xf32>
    %c0_10 = arith.constant 0 : index
    %c0_11 = arith.constant 0 : index
    %c0_12 = arith.constant 0 : index
    %32 = vector.load %arg1[%c0_10, %c0_11, %c0_12] : memref<2x4x256xf32, #tpu.memory_space<vmem>>, vector<2x4x256xf32>
    %33 = vector.broadcast %31 : vector<2x4x1xf32> to vector<2x4x256xf32>
    %34 = arith.mulf %32, %33 : vector<2x4x256xf32>
    %c0_13 = arith.constant 0 : index
    %c0_14 = arith.constant 0 : index
    %c0_15 = arith.constant 0 : index
    %35 = vector.load %arg3[%c0_13, %c0_14, %c0_15] : memref<2x4x256xf32, #tpu.memory_space<vmem>>, vector<2x4x256xf32>
    tpu.vector_store %arg3[%c0_13, %c0_14, %c0_15], %34 {strides = array<i32>} : memref<2x4x256xf32, #tpu.memory_space<vmem>>, vector<2x4x256xf32>,
    return
  }
  func.func @transform_0(%arg0: i32) -> (i32, i32, i32) {
    %c0_i32 = arith.constant 0 : i32
    %c0_i32_0 = arith.constant 0 : i32
    %c0_i32_1 = arith.constant 0 : i32
    return %arg0, %c0_i32, %c0_i32_0 : i32, i32, i32
  }
  func.func @transform_1(%arg0: i32) -> (i32, i32) {
    %c0_i32 = arith.constant 0 : i32
    %c0_i32_0 = arith.constant 0 : i32
    %c0_i32_1 = arith.constant 0 : i32
    return %c0_i32, %c0_i32_0 : i32, i32
  }
  func.func @transform_2(%arg0: i32) -> (i32, i32, i32) {
    %c0_i32 = arith.constant 0 : i32
    %c0_i32_0 = arith.constant 0 : i32
    %c0_i32_1 = arith.constant 0 : i32
    return %arg0, %c0_i32, %c0_i32_0 : i32, i32, i32
  }
}

</mosaic_0001>

<llo_original>
// kernel: tpu_custom_call.1
$region0: #{tpu_custom_call.1}
  #allocation0 [shape = 'u32[]', space=smem, size = 0x4, offset = 0x4, fixed_abs, tag = 'smem constant byte address 0x4 - core index']
  #allocation1 [shape = 'u32[144,128]{1,0:T(1,128)}', space=vmem, size = 0x12000, scoped, tag = 'internal scratch']
  %s0 = inlined_call_operand.hbm [shape: f32[2,4,256], index: 0, kind: input, shape index: {}]
  %s1 = inlined_call_operand.hbm [shape: f32[3,4], index: 1, kind: input, shape index: {}]
  %s2 = inlined_call_operand.hbm [shape: f32[2,4,256], index: 2, kind: output, shape index: {}]
  %s3 = sld [smem:[#allocation0]]
  $region26: #{tpu_custom_call.1} parent=0
    _
  %s5 = ssub.s32 1, %s3
  %s6 = scalar_select 0, %s5, %s3
  $region1: #{tpu_custom_call.1} parent=0
    #allocation2 [shape = 'u8[8192]{0}', space=vmem, size = 0x2000, scoped, tag = 'input window, operand 0, single buffered']
    #allocation3 [shape = 's32[1]{0}', space=sflag, size = 0x4, scoped, tag = 'scoped memory for tpu_custom_call.1']
    #allocation4 [shape = 's32[1]{0}', space=sflag, size = 0x4, scoped, tag = 'scoped memory for tpu_custom_call.1']
    #allocation5 [shape = 'u8[2048]{0}', space=vmem, size = 0x800, scoped, tag = 'input window, operand 1, single buffered']
    #allocation6 [shape = 's32[1]{0}', space=sflag, size = 0x4, scoped, tag = 'scoped memory for tpu_custom_call.1']
    #allocation7 [shape = 'u8[8192]{0}', space=vmem, size = 0x2000, scoped, tag = 'output window, operand 0, single buffered']
    %7 = vsyncpa [#allocation3], 0
    %8 = vsyncpa [#allocation6], 0
    %9 = vsyncpa [#allocation4], 0
    // Predicated region
    $region2: #{tpu_custom_call.1} parent=1 // pred_check
      _
    $region3: #{tpu_custom_call.1} parent=1 // pred_check_branch
      %11 = sbr.rel (0) target = $region5
    $region4: #{tpu_custom_call.1} parent=1 // pred_region
      %s13 = ssub.s32 256, 256
      %14 = vsyncadd [#allocation3], %s13
      %s15 = sshll.u32 [#allocation2], 4
      %s16 = int_to_ptr.vmem [resolvable:$true] %s15
      %21 = dma.hbm_to_vmem [thread:$0]  %s0, 256, %s16, [#allocation3], 128, 128, 8
    $region5: #{tpu_custom_call.1} parent=1 // pred_fallthru
      _
    // Predicated region
    $region6: #{tpu_custom_call.1} parent=1 // pred_check
      _
    $region7: #{tpu_custom_call.1} parent=1 // pred_check_branch
      %23 = sbr.rel (0) target = $region9
    $region8: #{tpu_custom_call.1} parent=1 // pred_region
      %s25 = ssub.s32 64, 64
      %26 = vsyncadd [#allocation6], %s25
      %s28 = sshll.u32 [#allocation5], 4
      %s29 = int_to_ptr.vmem [resolvable:$true] %s28
      %31 = dma.hbm_to_vmem [thread:$0]  %s1, 64, %s29, [#allocation6]
    $region9: #{tpu_custom_call.1} parent=1 // pred_fallthru
      _
    // Predicated region
    $region10: #{tpu_custom_call.1} parent=1 // pred_check
      _
    $region11: #{tpu_custom_call.1} parent=1 // pred_check_branch
      %33 = sbr.rel (0) target = $region13
    $region12: #{tpu_custom_call.1} parent=1 // pred_region
      %34 = dma.done [#allocation3], 256
    $region13: #{tpu_custom_call.1} parent=1 // pred_fallthru
      _
    // Predicated region
    $region14: #{tpu_custom_call.1} parent=1 // pred_check
      _
    $region15: #{tpu_custom_call.1} parent=1 // pred_check_branch
      %36 = sbr.rel (0) target = $region17
    $region16: #{tpu_custom_call.1} parent=1 // pred_region
      %37 = dma.done [#allocation6], 64
    $region17: #{tpu_custom_call.1} parent=1 // pred_fallthru
      _
    %v38 = vld [vmem:[#allocation2] sm:$0xff]
    %v39 = vld [vmem:[#allocation2 + $0x8] sm:$0xff]
    %v40 = vmul.f32 %v38, %v38
    %v41 = vmul.f32 %v39, %v39
    %v44 = vcombine.high %v40, %v40
    %v45 = vcombine.high %v41, %v41
    %vm48 = vcmask 1043456
    %v49 = vsel %vm48, %v40, 0.0
    %v50 = vsel %vm48, %v44, 0.0
    %v51 = vadd.f32 %v49, %v50
    %52 = vadd.xlane.f32.xlu0 %v51
    %v53 = vpop.xlane.xlu0 %52
    %v54 = vsel %vm48, %v41, 0.0
    %v55 = vsel %vm48, %v45, 0.0
    %v56 = vadd.f32 %v54, %v55
    %57 = vadd.xlane.f32.xlu0 %v56
    %v58 = vpop.xlane.xlu0 %57
    %v59 = vadd.f32 %v53, 0.0
    %v60 = vadd.f32 %v58, 0.0
    %v61 = vld [vmem:[#allocation5] sm:$0x7]
    %v62 = vadd.f32 %v59, 1e-05
    %v63 = vadd.f32 %v60, 1e-05
    %v64 = vrsqrt.pop %v62
    %v65 = vmul.f32 %v62, %v64
    %vm66 = vcmp.eq.f32.partialorder %v62, inf
    %v67 = vsel %vm66, %v62, %v65
    %vm68 = vcmp.eq.f32.partialorder %v62, 0.0
    %v69 = vand.u32 %v62, 2147483648
    %v70 = vsel %vm68, %v69, %v67
    %v71 = vrsqrt.pop %v63
    %v72 = vmul.f32 %v63, %v71
    %vm73 = vcmp.eq.f32.partialorder %v63, inf
    %v74 = vsel %vm73, %v63, %v72
    %vm75 = vcmp.eq.f32.partialorder %v63, 0.0
    %v76 = vand.u32 %v63, 2147483648
    %v77 = vsel %vm75, %v76, %v74
    %v78 = vlaneseq
    %v79 = vshrl.u32 %v78, 7
    %v80 = vsub.s32 0, %v79
    %v81 = vrot.slane %v61, %v80
    %84 = vbcast.lane.b32.xlu0 %v81, 256
    %v85 = vpop.permute.xlu0 %84
    %v87 = vmul.f32 %v70, %v85
    %v88 = vmul.f32 %v77, %v85
    %v89 = vmul.f32 %v87, %v87
    %v90 = vmul.f32 %v88, %v88
    %93 = vset.pattern.permute.xlu0 0
    %94 = vperm.xlu0 %93, %v89
    %v95 = vpop.permute.xlu0 %94
    %96 = vset.pattern.permute.xlu0 0
    %97 = vperm.xlu0 %96, %v90
    %v98 = vpop.permute.xlu0 %97
    %v99 = vlaneseq
    %v100 = vand.u32 %v99, 127
    %v101 = vlaneseq
    %v102 = vshrl.u32 %v101, 7
    %v103 = vsub.s32 %v100, %v102
    %v104 = vrot.slane %v95, %v103
    %v105 = vlaneseq
    %v106 = vshrl.u32 %v105, 7
    %v107 = vsub.s32 %v100, %v106
    %v108 = vrot.slane %v98, %v107
    %vm109 = vcmask 1041409
    %v110 = vsel %vm109, %v108, %v104
    %vm112 = vcmask 25600
    %v113 = vsel %vm112, %v110, 0.0
    %114 = vadd.xlane.f32.xlu0 %v113
    %v115 = vpop.xlane.xlu0 %114
    %v116 = vrcp.pop 4.0
    %v117 = vmul.f32 %v115, %v116
    %v118 = vadd.f32 %v117, 1e-05
    %v119 = vrsqrt.pop %v118
    %v120 = vlaneseq
    %v121 = vshrl.u32 %v120, 7
    %v122 = vsub.s32 1, %v121
    %v123 = vrot.slane %v61, %v122
    %v124 = vmul.f32 %v123, %v119
    %v126 = vlaneseq
    %v127 = vshrl.u32 %v126, 7
    %v128 = vsub.s32 0, %v127
    %v129 = vrot.slane %v124, %v128
    %131 = vbcast.lane.b32.xlu0 %v129, 256
    %v132 = vpop.permute.xlu0 %131
    %v133 = vlaneseq
    %v134 = vshrl.u32 %v133, 7
    %v135 = vsub.s32 1, %v134
    %v136 = vrot.slane %v124, %v135
    %138 = vbcast.lane.b32.xlu0 %v136, 256
    %v139 = vpop.permute.xlu0 %138
    %v142 = vmul.f32 %v87, %v132
    %v143 = vmul.f32 %v88, %v139
    %v144 = vlaneseq
    %v145 = vshrl.u32 %v144, 7
    %v146 = vsub.s32 2, %v145
    %v147 = vrot.slane %v61, %v146
    %150 = vbcast.lane.b32.xlu0 %v147, 256
    %v151 = vpop.permute.xlu0 %150
    %v153 = vadd.f32 %v142, %v151
    %v154 = vadd.f32 %v143, %v151
    %v155 = vtanh.pop %v153
    %v156 = vtanh.pop %v154
    %v157 = vadd.f32 %v155, 1.0
    %v158 = vadd.f32 %v156, 1.0
    %160 = vset.pattern.permute.xlu0 0
    %161 = vperm.xlu0 %160, %v157
    %v162 = vpop.permute.xlu0 %161
    %164 = vset.pattern.permute.xlu0 0
    %165 = vperm.xlu0 %164, %v158
    %v166 = vpop.permute.xlu0 %165
    %v168 = vunpack.c.l.s4 839922192
    %v169 = vunpack.c.0.s8 %v168
    %v170 = vlaneseq
    %v171 = vshrl.u32 %v170, 7
    %v172 = vsub.s32 %v169, %v171
    %v173 = vrot.slane %v162, %v172
    %v175 = vunpack.c.l.s4 839922192
    %v176 = vunpack.c.0.s8 %v175
    %v177 = vlaneseq
    %v178 = vshrl.u32 %v177, 7
    %v179 = vsub.s32 %v176, %v178
    %v180 = vrot.slane %v166, %v179
    %v183 = vmul.f32 %v38, %v173
    %v184 = vmul.f32 %v39, %v180
    %185 = vst [vmem:[#allocation7] sm:$0xff] %v183
    %186 = vst [vmem:[#allocation7 + $0x8] sm:$0xff] %v184
    // Predicated region
    $region18: #{tpu_custom_call.1} parent=1 // pred_check
      _
    $region19: #{tpu_custom_call.1} parent=1 // pred_check_branch
      %188 = sbr.rel (0) target = $region21
    $region20: #{tpu_custom_call.1} parent=1 // pred_region
      %s190 = ssub.s32 256, 256
      %191 = vsyncadd [#allocation4], %s190
      %s192 = sshll.u32 [#allocation7], 4
      %s193 = int_to_ptr.vmem [resolvable:$true] %s192
      %198 = dma.vmem_to_hbm [thread:$0]  %s193, 256, %s2, [#allocation4], 128, 128, 8
    $region21: #{tpu_custom_call.1} parent=1 // pred_fallthru
      _
    // Predicated region
    $region22: #{tpu_custom_call.1} parent=1 // pred_check
      _
    $region23: #{tpu_custom_call.1} parent=1 // pred_check_branch
      %200 = sbr.rel (0) target = $region25
    $region24: #{tpu_custom_call.1} parent=1 // pred_region
      %201 = dma.done [#allocation4], 256
    $region25: #{tpu_custom_call.1} parent=1 // pred_fallthru
      _
    %202 = vsyncpa [#allocation3], 1
    %203 = vsyncpa [#allocation6], 1
    %204 = vsyncpa [#allocation4], 1

</llo_original>
